<compile_context>
chip_gen: v6e
topology: v6e:2x2x1
jax: 0.10.0
libtpu: 0.0.40
codegen_flags: <defaults>
</compile_context>

<pallas_src>
from functools import partial

import numpy as np
import jax
import jax.numpy as jnp
from jax.experimental import pallas as pl
from jax.experimental.pallas import tpu as pltpu


def hertz_to_mel(hz):
    return 2595.0 * np.log10(1.0 + hz / 700.0)


def mel_to_hertz(mel):
    return 700.0 * (10.0 ** (mel / 2595.0) - 1.0)


def _round_up(x, m):
    return ((x + m - 1) // m) * m


# --------------------------------------------------------------------------- #
# Kernel 1: build the (C_pad, K_pad) sinc band-pass filter bank (runs once).
# --------------------------------------------------------------------------- #
def sinc_filter_kernel(low_ref, bwp_ref, tpn_ref, tpn_rev_ref, coef_ref,
                       coef_rev_ref, w_ref, *, kernel_size, k_pad,
                       freq_low, min_bandwidth_freq, sampling_rate):
    low = low_ref[...]          # (C_pad, 1)  lower_freq_hertz parameter (0 in pad rows)
    bwp = bwp_ref[...]          # (C_pad, 1)  bandwidth_hertz parameter
    tpn = tpn_ref[...]          # (1, half)   2*pi*n/fs, n = -(K-1)/2 .. -1
    tpn_r = tpn_rev_ref[...]    # (1, half)   reversed two_pi_n
    coef = coef_ref[...]        # (1, half)   hanning / floor(two_pi_n/2), precomputed
    coef_r = coef_rev_ref[...]  # (1, half)   reversed coefficient

    f1 = freq_low + jnp.abs(low)                                          # (C_pad, 1)
    f2 = jnp.clip(f1 + min_bandwidth_freq + jnp.abs(bwp),
                  freq_low, sampling_rate / 2.0)                          # (C_pad, 1)
    bandwidth = f2 - f1                                                   # (C_pad, 1)
    inv_two_bw = pl.reciprocal(2.0 * bandwidth)                           # accurate 1/(2*bw)

    # band_pass_left and its mirror (right == flip(left) by construction of the
    # reversed constants), matching torch exactly for this config (denom == -1.0).
    left = (jnp.sin(f2 * tpn) - jnp.sin(f1 * tpn)) * coef                 # (C_pad, half)
    right = (jnp.sin(f2 * tpn_r) - jnp.sin(f1 * tpn_r)) * coef_r          # (C_pad, half)
    centre = bandwidth * tpn[:, 0:1]                                      # (C_pad, 1)

    w = jnp.concatenate([left, centre, right], axis=1) * inv_two_bw       # (C_pad, K)
    if k_pad > kernel_size:                                               # zero pad taps
        w = jnp.concatenate(
            [w, jnp.zeros((w.shape[0], k_pad - kernel_size), jnp.float32)], axis=1)
    w_ref[...] = w


# --------------------------------------------------------------------------- #
# Kernel 2: im2col + MXU matmul conv1d, gridded over (batch, time-tile).
# --------------------------------------------------------------------------- #
def sinc_conv_kernel(w_ref, x_hbm_ref, o_ref, xwin_ref, patch_ref, dma_sem, *,
                     kernel_size, k_pad, tile_t, stride, dilation, span_pad,
                     mxu_dtype):
    bi = pl.program_id(0)                 # batch index
    ti = pl.program_id(1)                 # time-tile index
    off = ti * (tile_t * stride)          # element offset of this tile's haloed window

    # Manual haloed DMA: HBM -> VMEM window of span_pad samples for this tile.
    cp = pltpu.make_async_copy(
        x_hbm_ref.at[pl.ds(bi, 1), pl.ds(off, span_pad)], xwin_ref, dma_sem)
    cp.start()
    cp.wait()

    # im2col: patch[k, j] = x[off + j*stride + k*dilation].  Static shifted ref
    # slices, fully unrolled (no cross-iteration live values), then ONE MXU matmul.
    for k in range(kernel_size):
        start = k * dilation
        if stride == 1:
            row = xwin_ref[:, pl.ds(start, tile_t)]
        else:
            row = xwin_ref[:, pl.ds(start, tile_t, stride=stride)]
        patch_ref[pl.ds(k, 1), :] = row

    if k_pad > kernel_size:  # keep pad taps zero so they contribute nothing
        patch_ref[kernel_size:k_pad, :] = jnp.zeros(
            (k_pad - kernel_size, tile_t), jnp.float32)

    acc = jnp.dot(w_ref[...].astype(mxu_dtype), patch_ref[...].astype(mxu_dtype),
                  preferred_element_type=jnp.float32)          # (C_pad, tile_t) on MXU
    o_ref[...] = acc[None, :, :].astype(o_ref.dtype)


# --------------------------------------------------------------------------- #
# Wrapper
# --------------------------------------------------------------------------- #
class SincConvPallas:
    def __init__(self, out_channels: int, kernel_size: int, inp_channels: int = 1,
                 stride: int = 1, padding: int = 0, dilation: int = 1,
                 freq_low: int = 30, min_bandwidth_freq: int = 50,
                 sampling_rate: int = 16000, time_tile: int = 512,
                 mxu_dtype=jnp.float32):
        if inp_channels != 1:
            raise ValueError("sincnet only supports mono channel")
        if kernel_size % 2 == 0:
            raise ValueError("kernel size must be odd")
        if stride < 1:
            raise ValueError("stride must be >= 1 (torch default stride=0 is invalid)")
        self.out_channels = out_channels
        self.kernel_size = kernel_size
        self.stride = stride
        self.padding = padding
        self.dilation = dilation
        self.sampling_rate = float(sampling_rate)
        self.freq_low = float(freq_low)
        self.min_bandwidth_freq = float(min_bandwidth_freq)
        self.time_tile = max(128, time_tile)
        self.mxu_dtype = mxu_dtype        # jnp.bfloat16 doubles MXU rate on v6e/v7x

        self.c_pad = _round_up(out_channels, 8)      # f32 sublane tile
        self.k_pad = _round_up(kernel_size, 8)
        half = kernel_size // 2

        # deterministic parameter init (identical to the torch module's __init__),
        # zero-padded to c_pad channels (pad rows are sliced off at the end).
        low_freq_hertz = 30
        max_freq_hertz = sampling_rate / 2 - (freq_low + min_bandwidth_freq)
        mel = np.linspace(hertz_to_mel(low_freq_hertz), hertz_to_mel(max_freq_hertz),
                          out_channels + 1)
        hz = mel_to_hertz(mel)
        low = np.zeros((self.c_pad, 1), np.float32)
        low[:out_channels, 0] = hz[:-1].astype(np.float32)
        bwp = np.zeros((self.c_pad, 1), np.float32)
        bwp[:out_channels, 0] = np.diff(hz).astype(np.float32)
        self.lower_freq_hertz = jnp.asarray(low)      # (C_pad, 1)
        self.bandwidth_hertz = jnp.asarray(bwp)       # (C_pad, 1)

        # constants hoisted out of the kernels: two_pi_n, its reverse, and the
        # combined hanning/floor(two_pi_n/2) coefficient (and its reverse).
        N = np.linspace(0.0, kernel_size / 2 - 1, half)
        han = (0.54 - 0.46 * np.cos(2 * np.pi * N / kernel_size)).astype(np.float32)
        n = np.arange(-(kernel_size - 1) / 2, 0, dtype=np.float32)
        tpn = (2.0 * np.pi * n / sampling_rate).astype(np.float32)
        denom = np.floor(tpn / 2.0)                   # torch.div(..., rounding_mode='floor')
        coef = (han / denom).astype(np.float32)
        self.two_pi_n = jnp.asarray(tpn.reshape(1, -1))
        self.two_pi_n_rev = jnp.asarray(tpn[::-1].copy().reshape(1, -1))
        self.coef = jnp.asarray(coef.reshape(1, -1))
        self.coef_rev = jnp.asarray(coef[::-1].copy().reshape(1, -1))

    def __call__(self, sample):
        # sample: (B, 1, L) float32, NCW like torch conv1d
        b, cin, length = sample.shape
        assert cin == 1
        x = sample[:, 0, :].astype(jnp.float32)
        if self.padding:
            x = jnp.pad(x, ((0, 0), (self.padding, self.padding)))
        l_pad = length + 2 * self.padding
        t_out = (l_pad - self.dilation * (self.kernel_size - 1) - 1) // self.stride + 1
        assert t_out > 0

        # time tiling: tile multiple of 128, T padded to a multiple of tile.
        tile = max(128, min(self.time_tile, _round_up(t_out, 128)))
        t_pad = _round_up(t_out, tile)
        n_t = t_pad // tile
        span = (tile - 1) * self.stride + (self.kernel_size - 1) * self.dilation + 1
        span_pad = _round_up(span, 128)
        l_dma = max(l_pad, (n_t - 1) * tile * self.stride + span_pad)
        if l_dma > l_pad:
            x = jnp.pad(x, ((0, 0), (0, l_dma - l_pad)))   # zeros; padded T sliced off

        # --- build the filter bank once (tiny single-shot kernel) ---
        w = pl.pallas_call(
            partial(sinc_filter_kernel,
                    kernel_size=self.kernel_size, k_pad=self.k_pad,
                    freq_low=self.freq_low,
                    min_bandwidth_freq=self.min_bandwidth_freq,
                    sampling_rate=self.sampling_rate),
            out_shape=jax.ShapeDtypeStruct((self.c_pad, self.k_pad), jnp.float32),
            in_specs=[pl.BlockSpec(memory_space=pltpu.MemorySpace.VMEM)] * 6,
            out_specs=pl.BlockSpec(memory_space=pltpu.MemorySpace.VMEM),
        )(self.lower_freq_hertz, self.bandwidth_hertz, self.two_pi_n,
          self.two_pi_n_rev, self.coef, self.coef_rev)

        # --- im2col + MXU matmul conv, gridded over (batch, time tiles) ---
        conv_kernel = partial(
            sinc_conv_kernel,
            kernel_size=self.kernel_size, k_pad=self.k_pad, tile_t=tile,
            stride=self.stride, dilation=self.dilation, span_pad=span_pad,
            mxu_dtype=self.mxu_dtype)

        out = pl.pallas_call(
            conv_kernel,
            out_shape=jax.ShapeDtypeStruct((b, self.c_pad, t_pad), jnp.float32),
            grid=(b, n_t),
            in_specs=[
                # filter bank: whole array, fetched into VMEM once (constant block idx)
                pl.BlockSpec((self.c_pad, self.k_pad), lambda bi, ti: (0, 0)),
                # raw input stays in HBM; haloed windows are DMA'd manually per tile
                pl.BlockSpec(memory_space=pl.ANY),
            ],
            out_specs=pl.BlockSpec((1, self.c_pad, tile), lambda bi, ti: (bi, 0, ti)),
            scratch_shapes=[
                pltpu.VMEM((1, span_pad), jnp.float32),       # haloed input window
                pltpu.VMEM((self.k_pad, tile), jnp.float32),  # im2col patch matrix
                pltpu.SemaphoreType.DMA,
            ],
            compiler_params=pltpu.CompilerParams(
                dimension_semantics=("parallel", "parallel"),
                vmem_limit_bytes=32 * 1024 * 1024),
        )(w, x)

        # strip channel / time padding
        return out[:, :self.out_channels, :t_out]


if __name__ == "__main__":
    key = jax.random.PRNGKey(0)
    B, L = 2, 512
    sample = jax.random.normal(key, (B, 1, L), dtype=jnp.float32)

    # note: the torch module's default stride=0 is invalid for conv1d; use stride=1.
    conv = SincConvPallas(out_channels=8, kernel_size=31,
                          stride=1, padding=0, dilation=1)
    out = conv(sample)
    jax.block_until_ready(out)
    assert out.shape == (B, 8, L - 31 + 1), out.shape
    assert out.dtype == jnp.float32
    assert bool(jnp.all(jnp.isfinite(out)))

    # --- numpy reference replicating the torch math (loose tol: MXU may use bf16 passes) ---
    K, C, fs = 31, 8, 16000.0
    half = K // 2
    mel = np.linspace(hertz_to_mel(30), hertz_to_mel(fs / 2 - (30 + 50)), C + 1)
    hz = mel_to_hertz(mel)
    low = hz[:-1].astype(np.float32).reshape(-1, 1)
    bwp = np.diff(hz).astype(np.float32).reshape(-1, 1)
    N = np.linspace(0.0, K / 2 - 1, half)
    han = (0.54 - 0.46 * np.cos(2 * np.pi * N / K)).astype(np.float32).reshape(1, -1)
    n = np.arange(-(K - 1) / 2, 0, dtype=np.float32)
    tpn = (2.0 * np.pi * n / fs).astype(np.float32).reshape(1, -1)
    f1 = np.float32(30.0) + np.abs(low)
    f2 = np.clip(f1 + np.float32(50.0) + np.abs(bwp), 30.0, fs / 2).astype(np.float32)
    bw = f2 - f1
    left = (np.sin(f2 * tpn) - np.sin(f1 * tpn)) / np.floor(tpn / 2.0) * han
    centre = bw * tpn[:, 0:1]
    filt = np.concatenate([left, centre, left[:, ::-1]], axis=1) / (2.0 * bw)   # (C, K)
    xs = np.asarray(sample[:, 0, :], dtype=np.float32)
    win = np.lib.stride_tricks.sliding_window_view(xs, K, axis=1)               # (B, T, K)
    ref = np.einsum('btk,ck->bct', win, filt)
    np.testing.assert_allclose(np.asarray(out), ref, rtol=3e-2, atol=5e-3)

    print("KERNEL_OK")
</pallas_src>

<mosaic_0001>
module attributes {stable_mosaic.version = 11 : i64} {
  func.func @sinc_filter_kernel(%arg0: memref<8x1xf32, #tpu.memory_space<vmem>>, %arg1: memref<8x1xf32, #tpu.memory_space<vmem>>, %arg2: memref<1x15xf32, #tpu.memory_space<vmem>>, %arg3: memref<1x15xf32, #tpu.memory_space<vmem>>, %arg4: memref<1x15xf32, #tpu.memory_space<vmem>>, %arg5: memref<1x15xf32, #tpu.memory_space<vmem>>, %arg6: memref<8x32xf32, #tpu.memory_space<vmem>>) attributes {dimension_semantics = [], scalar_prefetch = 0 : i64, scratch_operands = 0 : i64, tpu.core_type = #tpu.core_type<tc>} {
    %c0 = arith.constant 0 : index
    %c0_0 = arith.constant 0 : index
    %0 = vector.load %arg0[%c0, %c0_0] : memref<8x1xf32, #tpu.memory_space<vmem>>, vector<8x1xf32>
    %c0_1 = arith.constant 0 : index
    %c0_2 = arith.constant 0 : index
    %1 = vector.load %arg1[%c0_1, %c0_2] : memref<8x1xf32, #tpu.memory_space<vmem>>, vector<8x1xf32>
    %c0_3 = arith.constant 0 : index
    %c0_4 = arith.constant 0 : index
    %2 = vector.load %arg2[%c0_3, %c0_4] : memref<1x15xf32, #tpu.memory_space<vmem>>, vector<1x15xf32>
    %c0_5 = arith.constant 0 : index
    %c0_6 = arith.constant 0 : index
    %3 = vector.load %arg3[%c0_5, %c0_6] : memref<1x15xf32, #tpu.memory_space<vmem>>, vector<1x15xf32>
    %c0_7 = arith.constant 0 : index
    %c0_8 = arith.constant 0 : index
    %4 = vector.load %arg4[%c0_7, %c0_8] : memref<1x15xf32, #tpu.memory_space<vmem>>, vector<1x15xf32>
    %c0_9 = arith.constant 0 : index
    %c0_10 = arith.constant 0 : index
    %5 = vector.load %arg5[%c0_9, %c0_10] : memref<1x15xf32, #tpu.memory_space<vmem>>, vector<1x15xf32>
    %6 = math.absf %0 : vector<8x1xf32>
    %cst = arith.constant 3.000000e+01 : f32
    %7 = vector.broadcast %cst : f32 to vector<8x1xf32>
    %8 = arith.addf %7, %6 : vector<8x1xf32>
    %cst_11 = arith.constant 5.000000e+01 : f32
    %9 = vector.broadcast %cst_11 : f32 to vector<8x1xf32>
    %10 = arith.addf %8, %9 : vector<8x1xf32>
    %11 = math.absf %1 : vector<8x1xf32>
    %12 = arith.addf %10, %11 : vector<8x1xf32>
    %cst_12 = arith.constant 3.000000e+01 : f32
    %cst_13 = arith.constant 8.000000e+03 : f32
    %13 = vector.broadcast %cst_12 : f32 to vector<8x1xf32>
    %14 = arith.maximumf %13, %12 : vector<8x1xf32>
    %15 = vector.broadcast %cst_13 : f32 to vector<8x1xf32>
    %16 = arith.minimumf %15, %14 : vector<8x1xf32>
    %17 = arith.subf %16, %8 : vector<8x1xf32>
    %cst_14 = arith.constant 2.000000e+00 : f32
    %18 = vector.broadcast %cst_14 : f32 to vector<8x1xf32>
    %19 = arith.mulf %18, %17 : vector<8x1xf32>
    %20 = tpu.reciprocal %19 : vector<8x1xf32> -> vector<8x1xf32>
    %21 = vector.broadcast %16 : vector<8x1xf32> to vector<8x15xf32>
    %22 = vector.broadcast %2 : vector<1x15xf32> to vector<8x15xf32>
    %23 = arith.mulf %21, %22 : vector<8x15xf32>
    %24 = math.sin %23 : vector<8x15xf32>
    %25 = vector.broadcast %8 : vector<8x1xf32> to vector<8x15xf32>
    %26 = vector.broadcast %2 : vector<1x15xf32> to vector<8x15xf32>
    %27 = arith.mulf %25, %26 : vector<8x15xf32>
    %28 = math.sin %27 : vector<8x15xf32>
    %29 = arith.subf %24, %28 : vector<8x15xf32>
    %30 = vector.broadcast %4 : vector<1x15xf32> to vector<8x15xf32>
    %31 = arith.mulf %29, %30 : vector<8x15xf32>
    %32 = vector.broadcast %16 : vector<8x1xf32> to vector<8x15xf32>
    %33 = vector.broadcast %3 : vector<1x15xf32> to vector<8x15xf32>
    %34 = arith.mulf %32, %33 : vector<8x15xf32>
    %35 = math.sin %34 : vector<8x15xf32>
    %36 = vector.broadcast %8 : vector<8x1xf32> to vector<8x15xf32>
    %37 = vector.broadcast %3 : vector<1x15xf32> to vector<8x15xf32>
    %38 = arith.mulf %36, %37 : vector<8x15xf32>
    %39 = math.sin %38 : vector<8x15xf32>
    %40 = arith.subf %35, %39 : vector<8x15xf32>
    %41 = vector.broadcast %5 : vector<1x15xf32> to vector<8x15xf32>
    %42 = arith.mulf %40, %41 : vector<8x15xf32>
    %43 = vector.extract_strided_slice %2 {offsets = [0, 0], sizes = [1, 1], strides = [1, 1]} : vector<1x15xf32> to vector<1x1xf32>
    %44 = vector.broadcast %43 : vector<1x1xf32> to vector<8x1xf32>
    %45 = arith.mulf %17, %44 : vector<8x1xf32>
    %46 = tpu.concatenate %31, %45, %42 in 1 : vector<8x15xf32>, vector<8x1xf32>, vector<8x15xf32> -> vector<8x31xf32>
    %47 = vector.broadcast %20 : vector<8x1xf32> to vector<8x31xf32>
    %48 = arith.mulf %46, %47 : vector<8x31xf32>
    %cst_15 = arith.constant 0.000000e+00 : f32
    %49 = vector.broadcast %cst_15 : f32 to vector<8x1xf32>
    %50 = tpu.concatenate %48, %49 in 1 : vector<8x31xf32>, vector<8x1xf32> -> vector<8x32xf32>
    %c0_16 = arith.constant 0 : index
    %c0_17 = arith.constant 0 : index
    %51 = vector.load %arg6[%c0_16, %c0_17] : memref<8x32xf32, #tpu.memory_space<vmem>>, vector<8x32xf32>
    tpu.vector_store %arg6[%c0_16, %c0_17], %50 {strides = array<i32>} : memref<8x32xf32, #tpu.memory_space<vmem>>, vector<8x32xf32>,
    return
  }
}

</mosaic_0001>

<llo_original>
// kernel: tpu_custom_call.1
$region0: #{tpu_custom_call.1}
  #allocation0 [shape = 'u32[]', space=smem, size = 0x4, offset = 0x4, fixed_abs, tag = 'smem constant byte address 0x4 - core index']
  #allocation1 [shape = 'u32[144,128]{1,0:T(1,128)}', space=vmem, size = 0x12000, scoped, tag = 'internal scratch']
  %s0 = inlined_call_operand.vmem [shape: f32[8,1], index: 0, kind: input, shape index: {}]
  %s1 = inlined_call_operand.vmem [shape: f32[8,1], index: 1, kind: input, shape index: {}]
  %s2 = inlined_call_operand.vmem [shape: f32[1,15], index: 2, kind: input, shape index: {}]
  %s3 = inlined_call_operand.vmem [shape: f32[1,15], index: 3, kind: input, shape index: {}]
  %s4 = inlined_call_operand.vmem [shape: f32[1,15], index: 4, kind: input, shape index: {}]
  %s5 = inlined_call_operand.vmem [shape: f32[1,15], index: 5, kind: input, shape index: {}]
  %s6 = inlined_call_operand.hbm [shape: f32[8,32], index: 6, kind: output, shape index: {}]
  %s7 = sld [smem:[#allocation0]]
  $region34: #{tpu_custom_call.1} parent=0
    _
  %s9 = ssub.s32 1, %s7
  %s10 = scalar_select 0, %s9, %s7
  $region1: #{tpu_custom_call.1} parent=0
    #allocation2 [shape = 'u8[4096]{0}', space=vmem, size = 0x1000, scoped, tag = 'output window, operand 0, single buffered']
    #allocation3 [shape = 's32[1]{0}', space=sflag, size = 0x4, scoped, tag = 'scoped memory for tpu_custom_call.1']
    %11 = vsyncpa [#allocation3], 0
    // Predicated region
    $region2: #{tpu_custom_call.1} parent=1 // pred_check
      _
    $region3: #{tpu_custom_call.1} parent=1 // pred_check_branch
      %13 = sbr.rel (0) target = $region5
    $region4: #{tpu_custom_call.1} parent=1 // pred_region
      _
    $region5: #{tpu_custom_call.1} parent=1 // pred_fallthru
      _
    // Predicated region
    $region6: #{tpu_custom_call.1} parent=1 // pred_check
      _
    $region7: #{tpu_custom_call.1} parent=1 // pred_check_branch
      %15 = sbr.rel (0) target = $region9
    $region8: #{tpu_custom_call.1} parent=1 // pred_region
      _
    $region9: #{tpu_custom_call.1} parent=1 // pred_fallthru
      _
    // Predicated region
    $region10: #{tpu_custom_call.1} parent=1 // pred_check
      _
    $region11: #{tpu_custom_call.1} parent=1 // pred_check_branch
      %17 = sbr.rel (0) target = $region13
    $region12: #{tpu_custom_call.1} parent=1 // pred_region
      _
    $region13: #{tpu_custom_call.1} parent=1 // pred_fallthru
      _
    // Predicated region
    $region14: #{tpu_custom_call.1} parent=1 // pred_check
      _
    $region15: #{tpu_custom_call.1} parent=1 // pred_check_branch
      %19 = sbr.rel (0) target = $region17
    $region16: #{tpu_custom_call.1} parent=1 // pred_region
      _
    $region17: #{tpu_custom_call.1} parent=1 // pred_fallthru
      _
    // Predicated region
    $region18: #{tpu_custom_call.1} parent=1 // pred_check
      _
    $region19: #{tpu_custom_call.1} parent=1 // pred_check_branch
      %21 = sbr.rel (0) target = $region21
    $region20: #{tpu_custom_call.1} parent=1 // pred_region
      _
    $region21: #{tpu_custom_call.1} parent=1 // pred_fallthru
      _
    // Predicated region
    $region22: #{tpu_custom_call.1} parent=1 // pred_check
      _
    $region23: #{tpu_custom_call.1} parent=1 // pred_check_branch
      %23 = sbr.rel (0) target = $region25
    $region24: #{tpu_custom_call.1} parent=1 // pred_region
      _
    $region25: #{tpu_custom_call.1} parent=1 // pred_fallthru
      _
    %v24 = vld [vmem:[%s0] sm:$0xff]
    %v25 = vld [vmem:[%s1] sm:$0xff]
    %v26 = vld [vmem:[%s2] sm:$0x1]
    %v27 = vld [vmem:[%s3] sm:$0x1]
    %v28 = vld [vmem:[%s4] sm:$0x1]
    %v29 = vld [vmem:[%s5] sm:$0x1]
    %v30 = vand.u32 2147483647, %v24
    %v31 = vadd.f32 %v30, 30.0
    %v32 = vadd.f32 %v31, 50.0
    %v33 = vand.u32 2147483647, %v25
    %v34 = vadd.f32 %v32, %v33
    %v35 = vmax.f32 %v34, 30.0
    %v36 = vmin.f32 %v35, 8000.0
    %v37 = vsub.f32 %v36, %v31
    %v38 = vmul.f32 %v37, 2.0
    %v39 = vrcp.pop %v38
    %41 = vset.pattern.permute.xlu0 0
    %42 = vperm.xlu0 %41, %v36
    %v43 = vpop.permute.xlu0 %42
    %v46 = vlaneseq
    %v47 = vshrl.u32 %v46, 7
    %v48 = vsub.s32 0, %v47
    %v49 = vrot.slane %v26, %v48
    %v51 = vmul.f32 %v43, %v49
    %v52 = vand.u32 2147483647, %v51
    %vm53 = vcmp.le.f32.partialorder %v52, 0.7853982
    %vm54 = vcmp.lt.s32.totalorder %v51, 0
    %v55 = vand.u32 %v51, 2139095040
    %v56 = vshrl.u32 %v55, 23
    %v57 = vsub.s32 %v56, 127
    %v58 = vand.u32 2147483647, %v51
    %v59 = vand.u32 %v58, 8388607
    %v60 = vor.u32 %v59, 8388608
    %v61 = vsub.s32 0, %v60
    %v62 = vadd.s32 %v57, 1
    %vm63 = vcmp.gt.s32.totalorder %v62, 0
    %v64 = vsel %vm63, %v62, 0
    %v65 = vshrl.u32 %v64, 5
    %v66 = vand.u32 %v64, 31
    %v67 = vsub.s32 32, %v66
    %v68 = vshrl.u32 683565275, %v67
    %v69 = vshll.u32 683565275, %v66
    %v70 = vshrl.u32 2475754826, %v67
    %v71 = vor.u32 %v69, %v70
    %v72 = vshll.u32 2475754826, %v66
    %v73 = vshrl.u32 2131351028, %v67
    %v74 = vor.u32 %v72, %v73
    %v75 = vshll.u32 2131351028, %v66
    %v76 = vshrl.u32 2102212464, %v67
    %v77 = vor.u32 %v75, %v76
    %v78 = vshll.u32 2102212464, %v66
    %v79 = vshrl.u32 920167782, %v67
    %v80 = vor.u32 %v78, %v79
    %v81 = vshll.u32 920167782, %v66
    %v82 = vshrl.u32 1326507024, %v67
    %v83 = vor.u32 %v81, %v82
    %vm84 = vcmp.lt.s32.totalorder %v65, 1
    %vm85 = vcmp.lt.s32.totalorder %v65, 2
    %vm86 = vcmp.lt.s32.totalorder %v65, 3
    %vm87 = vcmp.lt.s32.totalorder %v65, 4
    %v88 = vsel %vm84, %v68, %v71
    %v89 = vsel %vm87, %v77, 2102212464
    %v90 = vsel %vm86, %v74, %v89
    %v91 = vsel %vm85, %v88, %v90
    %v92 = vsel %vm84, %v71, %v74
    %v93 = vsel %vm87, %v80, 920167782
    %v94 = vsel %vm86, %v77, %v93
    %v95 = vsel %vm85, %v92, %v94
    %v96 = vsel %vm84, %v74, %v77
    %v97 = vsel %vm87, %v83, 1326507024
    %v98 = vsel %vm86, %v80, %v97
    %v99 = vsel %vm85, %v96, %v98
    %v100 = vshll.u32 %v60, 8
    %v101 = vmul.u32.u64.compose %v100, %v99
    %v102 = vextract.low.u32 %v101
    %v103 = vextract.high.u32 %v101
    %v104 = vmul.u32.u64.compose %v100, %v95
    %v105 = vextract.low.u32 %v104
    %v106 = vextract.high.u32 %v104
    %v107 = vmul.u32 %v100, %v91
    %v108 = vadd.s32 %v103, %v105
    %vm109 = vc.u32 %v103, %v105
    %v110 = vadd.s32 %v106, 1
    %v111 = vsel %vm109, %v110, %v106
    %v112 = vadd.s32 %v107, %v111
    %v113 = vadd.s32 %v112, 536870912
    %v114 = vshrl.u32 %v113, 30
    %v115 = vshll.u32 %v114, 30
    %v116 = vsub.s32 %v112, %v115
    %vm117 = vcmp.lt.s32.totalorder %v116, 0
    %v118 = vsub.s32 0, %v116
    %v119 = vsel %vm117, %v118, %v116
    %v120 = vclz %v119
    %v121 = vsub.s32 %v120, 2
    %vm122 = vcmp.gt.s32.totalorder 0, %v121
    %v123 = vsel %vm122, 0, %v121
    %v124 = vsub.s32 32, %v123
    %v125 = vshll.u32 %v116, %v123
    %v126 = vshrl.u32 %v108, %v124
    %v127 = vor.u32 %v125, %v126
    %v128 = vsub.s32 4294967266, %v123
    %v129 = vadd.s32 %v128, 127
    %v130 = vshll.u32 %v129, 23
    %v131 = vor.u32 4788187, %v130
    %v132 = vand.u32 2147483647, %v131
    %v134 = vcvt.s32.f32 %v127
    %v135 = vmul.f32 %v134, %v132
    %v136 = vxor.u32 %v135, 2147483648
    %v137 = vsel %vm54, %v136, %v135
    %v138 = vsub.s32 4, %v114
    %v139 = vsel %vm54, %v138, %v114
    %v140 = vsel %vm53, %v51, %v137
    %v141 = vsel %vm53, 0, %v139
    %v142 = vcosq.f32.pop %v140
    %v143 = vsinq.f32.pop %v140
    %vm144 = vweird.f32 %v51
    %v145 = vadd.s32 %v141, 3
    %v146 = vand.u32 %v145, 3
    %vm147 = vcmp.lt.s32.totalorder %v146, 2
    %vm148 = vcmp.eq.s32.totalorder %v146, 0
    %v149 = vxor.u32 %v143, 2147483648
    %v150 = vsel %vm148, %v142, %v149
    %vm151 = vcmp.eq.s32.totalorder %v146, 2
    %v152 = vxor.u32 %v142, 2147483648
    %v153 = vsel %vm151, %v152, %v143
    %v154 = vsel %vm147, %v150, %v153
    %v155 = vsel %vm144, nan, %v154
    %157 = vset.pattern.permute.xlu0 0
    %158 = vperm.xlu0 %157, %v31
    %v159 = vpop.permute.xlu0 %158
    %v161 = vmul.f32 %v159, %v49
    %v162 = vand.u32 2147483647, %v161
    %vm163 = vcmp.le.f32.partialorder %v162, 0.7853982
    %vm164 = vcmp.lt.s32.totalorder %v161, 0
    %v165 = vand.u32 %v161, 2139095040
    %v166 = vshrl.u32 %v165, 23
    %v167 = vsub.s32 %v166, 127
    %v168 = vand.u32 2147483647, %v161
    %v169 = vand.u32 %v168, 8388607
    %v170 = vor.u32 %v169, 8388608
    %v171 = vsub.s32 0, %v170
    %v172 = vadd.s32 %v167, 1
    %vm173 = vcmp.gt.s32.totalorder %v172, 0
    %v174 = vsel %vm173, %v172, 0
    %v175 = vshrl.u32 %v174, 5
    %v176 = vand.u32 %v174, 31
    %v177 = vsub.s32 32, %v176
    %v178 = vshrl.u32 683565275, %v177
    %v179 = vshll.u32 683565275, %v176
    %v180 = vshrl.u32 2475754826, %v177
    %v181 = vor.u32 %v179, %v180
    %v182 = vshll.u32 2475754826, %v176
    %v183 = vshrl.u32 2131351028, %v177
    %v184 = vor.u32 %v182, %v183
    %v185 = vshll.u32 2131351028, %v176
    %v186 = vshrl.u32 2102212464, %v177
    %v187 = vor.u32 %v185, %v186
    %v188 = vshll.u32 2102212464, %v176
    %v189 = vshrl.u32 920167782, %v177
    %v190 = vor.u32 %v188, %v189
    %v191 = vshll.u32 920167782, %v176
    %v192 = vshrl.u32 1326507024, %v177
    %v193 = vor.u32 %v191, %v192
    %vm194 = vcmp.lt.s32.totalorder %v175, 1
    %vm195 = vcmp.lt.s32.totalorder %v175, 2
    %vm196 = vcmp.lt.s32.totalorder %v175, 3
    %vm197 = vcmp.lt.s32.totalorder %v175, 4
    %v198 = vsel %vm194, %v178, %v181
    %v199 = vsel %vm197, %v187, 2102212464
    %v200 = vsel %vm196, %v184, %v199
    %v201 = vsel %vm195, %v198, %v200
    %v202 = vsel %vm194, %v181, %v184
    %v203 = vsel %vm197, %v190, 920167782
    %v204 = vsel %vm196, %v187, %v203
    %v205 = vsel %vm195, %v202, %v204
    %v206 = vsel %vm194, %v184, %v187
    %v207 = vsel %vm197, %v193, 1326507024
    %v208 = vsel %vm196, %v190, %v207
    %v209 = vsel %vm195, %v206, %v208
    %v210 = vshll.u32 %v170, 8
    %v211 = vmul.u32.u64.compose %v210, %v209
    %v212 = vextract.low.u32 %v211
    %v213 = vextract.high.u32 %v211
    %v214 = vmul.u32.u64.compose %v210, %v205
    %v215 = vextract.low.u32 %v214
    %v216 = vextract.high.u32 %v214
    %v217 = vmul.u32 %v210, %v201
    %v218 = vadd.s32 %v213, %v215
    %vm219 = vc.u32 %v213, %v215
    %v220 = vadd.s32 %v216, 1
    %v221 = vsel %vm219, %v220, %v216
    %v222 = vadd.s32 %v217, %v221
    %v223 = vadd.s32 %v222, 536870912
    %v224 = vshrl.u32 %v223, 30
    %v225 = vshll.u32 %v224, 30
    %v226 = vsub.s32 %v222, %v225
    %vm227 = vcmp.lt.s32.totalorder %v226, 0
    %v228 = vsub.s32 0, %v226
    %v229 = vsel %vm227, %v228, %v226
    %v230 = vclz %v229
    %v231 = vsub.s32 %v230, 2
    %vm232 = vcmp.gt.s32.totalorder 0, %v231
    %v233 = vsel %vm232, 0, %v231
    %v234 = vsub.s32 32, %v233
    %v235 = vshll.u32 %v226, %v233
    %v236 = vshrl.u32 %v218, %v234
    %v237 = vor.u32 %v235, %v236
    %v238 = vsub.s32 4294967266, %v233
    %v239 = vadd.s32 %v238, 127
    %v240 = vshll.u32 %v239, 23
    %v241 = vor.u32 4788187, %v240
    %v242 = vand.u32 2147483647, %v241
    %v244 = vcvt.s32.f32 %v237
    %v245 = vmul.f32 %v244, %v242
    %v246 = vxor.u32 %v245, 2147483648
    %v247 = vsel %vm164, %v246, %v245
    %v248 = vsub.s32 4, %v224
    %v249 = vsel %vm164, %v248, %v224
    %v250 = vsel %vm163, %v161, %v247
    %v251 = vsel %vm163, 0, %v249
    %v252 = vcosq.f32.pop %v250
    %v253 = vsinq.f32.pop %v250
    %vm254 = vweird.f32 %v161
    %v255 = vadd.s32 %v251, 3
    %v256 = vand.u32 %v255, 3
    %vm257 = vcmp.lt.s32.totalorder %v256, 2
    %vm258 = vcmp.eq.s32.totalorder %v256, 0
    %v259 = vxor.u32 %v253, 2147483648
    %v260 = vsel %vm258, %v252, %v259
    %vm261 = vcmp.eq.s32.totalorder %v256, 2
    %v262 = vxor.u32 %v252, 2147483648
    %v263 = vsel %vm261, %v262, %v253
    %v264 = vsel %vm257, %v260, %v263
    %v265 = vsel %vm254, nan, %v264
    %v266 = vsub.f32 %v155, %v265
    %v268 = vlaneseq
    %v269 = vshrl.u32 %v268, 7
    %v270 = vsub.s32 0, %v269
    %v271 = vrot.slane %v28, %v270
    %v273 = vmul.f32 %v266, %v271
    %v275 = vlaneseq
    %v276 = vshrl.u32 %v275, 7
    %v277 = vsub.s32 0, %v276
    %v278 = vrot.slane %v27, %v277
    %v280 = vmul.f32 %v43, %v278
    %v281 = vand.u32 2147483647, %v280
    %vm282 = vcmp.le.f32.partialorder %v281, 0.7853982
    %vm283 = vcmp.lt.s32.totalorder %v280, 0
    %v284 = vand.u32 %v280, 2139095040
    %v285 = vshrl.u32 %v284, 23
    %v286 = vsub.s32 %v285, 127
    %v287 = vand.u32 2147483647, %v280
    %v288 = vand.u32 %v287, 8388607
    %v289 = vor.u32 %v288, 8388608
    %v290 = vsub.s32 0, %v289
    %v291 = vadd.s32 %v286, 1
    %vm292 = vcmp.gt.s32.totalorder %v291, 0
    %v293 = vsel %vm292, %v291, 0
    %v294 = vshrl.u32 %v293, 5
    %v295 = vand.u32 %v293, 31
    %v296 = vsub.s32 32, %v295
    %v297 = vshrl.u32 683565275, %v296
    %v298 = vshll.u32 683565275, %v295
    %v299 = vshrl.u32 2475754826, %v296
    %v300 = vor.u32 %v298, %v299
    %v301 = vshll.u32 2475754826, %v295
    %v302 = vshrl.u32 2131351028, %v296
    %v303 = vor.u32 %v301, %v302
    %v304 = vshll.u32 2131351028, %v295
    %v305 = vshrl.u32 2102212464, %v296
    %v306 = vor.u32 %v304, %v305
    %v307 = vshll.u32 2102212464, %v295
    %v308 = vshrl.u32 920167782, %v296
    %v309 = vor.u32 %v307, %v308
    %v310 = vshll.u32 920167782, %v295
    %v311 = vshrl.u32 1326507024, %v296
    %v312 = vor.u32 %v310, %v311
    %vm313 = vcmp.lt.s32.totalorder %v294, 1
    %vm314 = vcmp.lt.s32.totalorder %v294, 2
    %vm315 = vcmp.lt.s32.totalorder %v294, 3
    %vm316 = vcmp.lt.s32.totalorder %v294, 4
    %v317 = vsel %vm313, %v297, %v300
    %v318 = vsel %vm316, %v306, 2102212464
    %v319 = vsel %vm315, %v303, %v318
    %v320 = vsel %vm314, %v317, %v319
    %v321 = vsel %vm313, %v300, %v303
    %v322 = vsel %vm316, %v309, 920167782
    %v323 = vsel %vm315, %v306, %v322
    %v324 = vsel %vm314, %v321, %v323
    %v325 = vsel %vm313, %v303, %v306
    %v326 = vsel %vm316, %v312, 1326507024
    %v327 = vsel %vm315, %v309, %v326
    %v328 = vsel %vm314, %v325, %v327
    %v329 = vshll.u32 %v289, 8
    %v330 = vmul.u32.u64.compose %v329, %v328
    %v331 = vextract.low.u32 %v330
    %v332 = vextract.high.u32 %v330
    %v333 = vmul.u32.u64.compose %v329, %v324
    %v334 = vextract.low.u32 %v333
    %v335 = vextract.high.u32 %v333
    %v336 = vmul.u32 %v329, %v320
    %v337 = vadd.s32 %v332, %v334
    %vm338 = vc.u32 %v332, %v334
    %v339 = vadd.s32 %v335, 1
    %v340 = vsel %vm338, %v339, %v335
    %v341 = vadd.s32 %v336, %v340
    %v342 = vadd.s32 %v341, 536870912
    %v343 = vshrl.u32 %v342, 30
    %v344 = vshll.u32 %v343, 30
    %v345 = vsub.s32 %v341, %v344
    %vm346 = vcmp.lt.s32.totalorder %v345, 0
    %v347 = vsub.s32 0, %v345
    %v348 = vsel %vm346, %v347, %v345
    %v349 = vclz %v348
    %v350 = vsub.s32 %v349, 2
    %vm351 = vcmp.gt.s32.totalorder 0, %v350
    %v352 = vsel %vm351, 0, %v350
    %v353 = vsub.s32 32, %v352
    %v354 = vshll.u32 %v345, %v352
    %v355 = vshrl.u32 %v337, %v353
    %v356 = vor.u32 %v354, %v355
    %v357 = vsub.s32 4294967266, %v352
    %v358 = vadd.s32 %v357, 127
    %v359 = vshll.u32 %v358, 23
    %v360 = vor.u32 4788187, %v359
    %v361 = vand.u32 2147483647, %v360
    %v363 = vcvt.s32.f32 %v356
    %v364 = vmul.f32 %v363, %v361
    %v365 = vxor.u32 %v364, 2147483648
    %v366 = vsel %vm283, %v365, %v364
    %v367 = vsub.s32 4, %v343
    %v368 = vsel %vm283, %v367, %v343
    %v369 = vsel %vm282, %v280, %v366
    %v370 = vsel %vm282, 0, %v368
    %v371 = vcosq.f32.pop %v369
    %v372 = vsinq.f32.pop %v369
    %vm373 = vweird.f32 %v280
    %v374 = vadd.s32 %v370, 3
    %v375 = vand.u32 %v374, 3
    %vm376 = vcmp.lt.s32.totalorder %v375, 2
    %vm377 = vcmp.eq.s32.totalorder %v375, 0
    %v378 = vxor.u32 %v372, 2147483648
    %v379 = vsel %vm377, %v371, %v378
    %vm380 = vcmp.eq.s32.totalorder %v375, 2
    %v381 = vxor.u32 %v371, 2147483648
    %v382 = vsel %vm380, %v381, %v372
    %v383 = vsel %vm376, %v379, %v382
    %v384 = vsel %vm373, nan, %v383
    %v385 = vmul.f32 %v159, %v278
    %v386 = vand.u32 2147483647, %v385
    %vm387 = vcmp.le.f32.partialorder %v386, 0.7853982
    %vm388 = vcmp.lt.s32.totalorder %v385, 0
    %v389 = vand.u32 %v385, 2139095040
    %v390 = vshrl.u32 %v389, 23
    %v391 = vsub.s32 %v390, 127
    %v392 = vand.u32 2147483647, %v385
    %v393 = vand.u32 %v392, 8388607
    %v394 = vor.u32 %v393, 8388608
    %v395 = vsub.s32 0, %v394
    %v396 = vadd.s32 %v391, 1
    %vm397 = vcmp.gt.s32.totalorder %v396, 0
    %v398 = vsel %vm397, %v396, 0
    %v399 = vshrl.u32 %v398, 5
    %v400 = vand.u32 %v398, 31
    %v401 = vsub.s32 32, %v400
    %v402 = vshrl.u32 683565275, %v401
    %v403 = vshll.u32 683565275, %v400
    %v404 = vshrl.u32 2475754826, %v401
    %v405 = vor.u32 %v403, %v404
    %v406 = vshll.u32 2475754826, %v400
    %v407 = vshrl.u32 2131351028, %v401
    %v408 = vor.u32 %v406, %v407
    %v409 = vshll.u32 2131351028, %v400
    %v410 = vshrl.u32 2102212464, %v401
    %v411 = vor.u32 %v409, %v410
    %v412 = vshll.u32 2102212464, %v400
    %v413 = vshrl.u32 920167782, %v401
    %v414 = vor.u32 %v412, %v413
    %v415 = vshll.u32 920167782, %v400
    %v416 = vshrl.u32 1326507024, %v401
    %v417 = vor.u32 %v415, %v416
    %vm418 = vcmp.lt.s32.totalorder %v399, 1
    %vm419 = vcmp.lt.s32.totalorder %v399, 2
    %vm420 = vcmp.lt.s32.totalorder %v399, 3
    %vm421 = vcmp.lt.s32.totalorder %v399, 4
    %v422 = vsel %vm418, %v402, %v405
    %v423 = vsel %vm421, %v411, 2102212464
    %v424 = vsel %vm420, %v408, %v423
    %v425 = vsel %vm419, %v422, %v424
    %v426 = vsel %vm418, %v405, %v408
    %v427 = vsel %vm421, %v414, 920167782
    %v428 = vsel %vm420, %v411, %v427
    %v429 = vsel %vm419, %v426, %v428
    %v430 = vsel %vm418, %v408, %v411
    %v431 = vsel %vm421, %v417, 1326507024
    %v432 = vsel %vm420, %v414, %v431
    %v433 = vsel %vm419, %v430, %v432
    %v434 = vshll.u32 %v394, 8
    %v435 = vmul.u32.u64.compose %v434, %v433
    %v436 = vextract.low.u32 %v435
    %v437 = vextract.high.u32 %v435
    %v438 = vmul.u32.u64.compose %v434, %v429
    %v439 = vextract.low.u32 %v438
    %v440 = vextract.high.u32 %v438
    %v441 = vmul.u32 %v434, %v425
    %v442 = vadd.s32 %v437, %v439
    %vm443 = vc.u32 %v437, %v439
    %v444 = vadd.s32 %v440, 1
    %v445 = vsel %vm443, %v444, %v440
    %v446 = vadd.s32 %v441, %v445
    %v447 = vadd.s32 %v446, 536870912
    %v448 = vshrl.u32 %v447, 30
    %v449 = vshll.u32 %v448, 30
    %v450 = vsub.s32 %v446, %v449
    %vm451 = vcmp.lt.s32.totalorder %v450, 0
    %v452 = vsub.s32 0, %v450
    %v453 = vsel %vm451, %v452, %v450
    %v454 = vclz %v453
    %v455 = vsub.s32 %v454, 2
    %vm456 = vcmp.gt.s32.totalorder 0, %v455
    %v457 = vsel %vm456, 0, %v455
    %v458 = vsub.s32 32, %v457
    %v459 = vshll.u32 %v450, %v457
    %v460 = vshrl.u32 %v442, %v458
    %v461 = vor.u32 %v459, %v460
    %v462 = vsub.s32 4294967266, %v457
    %v463 = vadd.s32 %v462, 127
    %v464 = vshll.u32 %v463, 23
    %v465 = vor.u32 4788187, %v464
    %v466 = vand.u32 2147483647, %v465
    %v468 = vcvt.s32.f32 %v461
    %v469 = vmul.f32 %v468, %v466
    %v470 = vxor.u32 %v469, 2147483648
    %v471 = vsel %vm388, %v470, %v469
    %v472 = vsub.s32 4, %v448
    %v473 = vsel %vm388, %v472, %v448
    %v474 = vsel %vm387, %v385, %v471
    %v475 = vsel %vm387, 0, %v473
    %v476 = vcosq.f32.pop %v474
    %v477 = vsinq.f32.pop %v474
    %vm478 = vweird.f32 %v385
    %v479 = vadd.s32 %v475, 3
    %v480 = vand.u32 %v479, 3
    %vm481 = vcmp.lt.s32.totalorder %v480, 2
    %vm482 = vcmp.eq.s32.totalorder %v480, 0
    %v483 = vxor.u32 %v477, 2147483648
    %v484 = vsel %vm482, %v476, %v483
    %vm485 = vcmp.eq.s32.totalorder %v480, 2
    %v486 = vxor.u32 %v476, 2147483648
    %v487 = vsel %vm485, %v486, %v477
    %v488 = vsel %vm481, %v484, %v487
    %v489 = vsel %vm478, nan, %v488
    %v490 = vsub.f32 %v384, %v489
    %v492 = vlaneseq
    %v493 = vshrl.u32 %v492, 7
    %v494 = vsub.s32 0, %v493
    %v495 = vrot.slane %v29, %v494
    %v497 = vmul.f32 %v490, %v495
    %v498 = vmul.f32 %v37, %v49
    %500 = vrot.lane.b32.xlu0 %v498, 15
    %v501 = vpop.permute.xlu0 %500
    %504 = vrot.lane.b32.xlu0 %v497, 16
    %v505 = vpop.permute.xlu0 %504
    %vm507 = vcmask 121856
    %v508 = vsel %vm507, %v273, %v501
    %vm509 = vcmask 130048
    %v510 = vsel %vm509, %v508, %v505
    %512 = vset.pattern.permute.xlu0 0
    %513 = vperm.xlu0 %512, %v39
    %v514 = vpop.permute.xlu0 %513
    %v516 = vmul.f32 %v510, %v514
    %vm517 = vcmask 252928
    %v518 = vsel %vm517, %v516, 0.0
    %vm519 = vcmask 261120
    %520 = vst.msk [vmem:[#allocation2] sm:$0xff] %vm519, %v518
    // Predicated region
    $region26: #{tpu_custom_call.1} parent=1 // pred_check
      _
    $region27: #{tpu_custom_call.1} parent=1 // pred_check_branch
      %522 = sbr.rel (0) target = $region29
    $region28: #{tpu_custom_call.1} parent=1 // pred_region
      %s524 = ssub.s32 128, 128
      %525 = vsyncadd [#allocation3], %s524
      %s527 = sshll.u32 [#allocation2], 4
      %s528 = int_to_ptr.vmem [resolvable:$true] %s527
      %530 = dma.vmem_to_hbm [thread:$0]  %s528, 128, %s6, [#allocation3]
    $region29: #{tpu_custom_call.1} parent=1 // pred_fallthru
      _
    // Predicated region
    $region30: #{tpu_custom_call.1} parent=1 // pred_check
      _
    $region31: #{tpu_custom_call.1} parent=1 // pred_check_branch
      %532 = sbr.rel (0) target = $region33
    $region32: #{tpu_custom_call.1} parent=1 // pred_region
      %533 = dma.done [#allocation3], 128
    $region33: #{tpu_custom_call.1} parent=1 // pred_fallthru
      _
    %534 = vsyncpa [#allocation3], 1

</llo_original>
